<compile_context>
chip_gen: v5e
topology: v5e:2x2
jax: 0.10.0
libtpu: 0.0.40
codegen_flags: <defaults>
</compile_context>

<pallas_src>
import jax
import jax.numpy as jnp
from jax import lax
from jax.experimental import pallas as pl
from jax.experimental.pallas import tpu as pltpu

_LANE = 128


def _round_up(x, m):
    return (x + m - 1) // m * m


# ---------------------------------------------------------------------------
# im2col helper for a 3x3, pad=1 convolution.
#   col_ref : VMEM scratch (Hq, Wq, 9*C)
#   t       : value        (Hq, Wq, C)
#   col[y, x, (3*dy+dx)*C + c] = t[y+dy-1, x+dx-1, c]   (zero outside image)
# Only static slices are used; the halo is realised by zero-init of the
# scratch, so no HBM-level jnp.pad is needed.
# ---------------------------------------------------------------------------
def _im2col_fill(col_ref, t):
    Hq, Wq, C = t.shape
    col_ref[...] = jnp.zeros(col_ref.shape, col_ref.dtype)
    for dy in range(3):
        ys = max(0, 1 - dy)
        ye = Hq - max(0, dy - 1)
        for dx in range(3):
            xs = max(0, 1 - dx)
            xe = Wq - max(0, dx - 1)
            tap = dy * 3 + dx
            col_ref[ys:ye, xs:xe, tap * C:(tap + 1) * C] = (
                t[ys + dy - 1:ye + dy - 1, xs + dx - 1:xe + dx - 1, :])


# ---------------------------------------------------------------------------
# Kernel A: maxpool(2x2) + conv1(3x3) + BN1 partial sums
# ---------------------------------------------------------------------------
def _pool_conv_kernel(x_ref, w_ref, y_ref, sum_ref, sq_ref, col_ref):
    # x_ref   : (1, Hp, 2, Wp, 2*Cin)  pool-friendly view of one image
    # w_ref   : (9*Cin, C1p)           conv1 weights, Cout zero-padded to C1p
    # y_ref   : (1, Hp, Wp, C1p)       conv1 pre-BN output (lane-dense)
    # sum_ref, sq_ref : (1, 1, C1p)    per-image BN1 partial sums
    # col_ref : VMEM (Hp, Wp, 9*Cin)   im2col scratch
    _, Hp, _, Wp, two_c = x_ref.shape
    cin = two_c // 2
    c1p = y_ref.shape[-1]

    x = x_ref[...][0]                                     # (Hp, 2, Wp, 2*Cin)
    xr = jnp.maximum(x[:, 0], x[:, 1])                    # row pairs
    xp = jnp.maximum(xr[:, :, :cin], xr[:, :, cin:])      # col pairs -> (Hp,Wp,Cin)

    _im2col_fill(col_ref, xp)
    patches = col_ref[...].reshape(Hp * Wp, 9 * cin)
    y = jnp.dot(patches, w_ref[...], preferred_element_type=jnp.float32)
    y_ref[...] = y.reshape(1, Hp, Wp, c1p)
    sum_ref[...] = jnp.sum(y, axis=0, keepdims=True)[None]
    sq_ref[...] = jnp.sum(y * y, axis=0, keepdims=True)[None]


def pool_conv1(x6, w1):
    N, Hp, _, Wp, two_c = x6.shape
    cin = two_c // 2
    c1p = w1.shape[-1]
    return pl.pallas_call(
        _pool_conv_kernel,
        out_shape=(
            jax.ShapeDtypeStruct((N, Hp, Wp, c1p), jnp.float32),
            jax.ShapeDtypeStruct((N, 1, c1p), jnp.float32),
            jax.ShapeDtypeStruct((N, 1, c1p), jnp.float32),
        ),
        grid=(N,),
        in_specs=[
            pl.BlockSpec((1, Hp, 2, Wp, two_c), lambda n: (n, 0, 0, 0, 0)),
            pl.BlockSpec((9 * cin, c1p), lambda n: (0, 0)),
        ],
        out_specs=(
            pl.BlockSpec((1, Hp, Wp, c1p), lambda n: (n, 0, 0, 0)),
            pl.BlockSpec((1, 1, c1p), lambda n: (n, 0, 0)),
            pl.BlockSpec((1, 1, c1p), lambda n: (n, 0, 0)),
        ),
        scratch_shapes=[pltpu.VMEM((Hp, Wp, 9 * cin), jnp.float32)],
        compiler_params=pltpu.CompilerParams(dimension_semantics=("parallel",)),
    )(x6, w1)


# ---------------------------------------------------------------------------
# Kernel B: BN1+ReLU prologue + conv2(3x3) + BN2 partial sums
# ---------------------------------------------------------------------------
def _bnrelu_conv_kernel(y_ref, s_ref, b_ref, w_ref, o_ref, sum_ref, sq_ref,
                        col_ref):
    _, Hp, Wp, c1p = y_ref.shape
    c2p = o_ref.shape[-1]

    y = y_ref[...][0]                                       # (Hp, Wp, C1p)
    act = jnp.maximum(y * s_ref[...] + b_ref[...], 0.0)     # BN1 + ReLU

    _im2col_fill(col_ref, act)
    patches = col_ref[...].reshape(Hp * Wp, 9 * c1p)
    o = jnp.dot(patches, w_ref[...], preferred_element_type=jnp.float32)
    o_ref[...] = o.reshape(1, Hp, Wp, c2p)
    sum_ref[...] = jnp.sum(o, axis=0, keepdims=True)[None]
    sq_ref[...] = jnp.sum(o * o, axis=0, keepdims=True)[None]


def bnrelu_conv2(y1, scale1, bias1, w2):
    N, Hp, Wp, c1p = y1.shape
    c2p = w2.shape[-1]
    return pl.pallas_call(
        _bnrelu_conv_kernel,
        out_shape=(
            jax.ShapeDtypeStruct((N, Hp, Wp, c2p), jnp.float32),
            jax.ShapeDtypeStruct((N, 1, c2p), jnp.float32),
            jax.ShapeDtypeStruct((N, 1, c2p), jnp.float32),
        ),
        grid=(N,),
        in_specs=[
            pl.BlockSpec((1, Hp, Wp, c1p), lambda n: (n, 0, 0, 0)),
            pl.BlockSpec((1, c1p), lambda n: (0, 0)),
            pl.BlockSpec((1, c1p), lambda n: (0, 0)),
            pl.BlockSpec((9 * c1p, c2p), lambda n: (0, 0)),
        ],
        out_specs=(
            pl.BlockSpec((1, Hp, Wp, c2p), lambda n: (n, 0, 0, 0)),
            pl.BlockSpec((1, 1, c2p), lambda n: (n, 0, 0)),
            pl.BlockSpec((1, 1, c2p), lambda n: (n, 0, 0)),
        ),
        scratch_shapes=[pltpu.VMEM((Hp, Wp, 9 * c1p), jnp.float32)],
        compiler_params=pltpu.CompilerParams(dimension_semantics=("parallel",)),
    )(y1, scale1, bias1, w2)


# ---------------------------------------------------------------------------
# Kernel C: BN2 + ReLU epilogue (elementwise, lane-dense)
# ---------------------------------------------------------------------------
def _bn_relu_kernel(y_ref, s_ref, b_ref, o_ref):
    y = y_ref[...][0]
    o_ref[...] = jnp.maximum(y * s_ref[...] + b_ref[...], 0.0)[None]


def bn_relu(y, scale, bias):
    N, Hp, Wp, cp = y.shape
    return pl.pallas_call(
        _bn_relu_kernel,
        out_shape=jax.ShapeDtypeStruct((N, Hp, Wp, cp), jnp.float32),
        grid=(N,),
        in_specs=[
            pl.BlockSpec((1, Hp, Wp, cp), lambda n: (n, 0, 0, 0)),
            pl.BlockSpec((1, cp), lambda n: (0, 0)),
            pl.BlockSpec((1, cp), lambda n: (0, 0)),
        ],
        out_specs=pl.BlockSpec((1, Hp, Wp, cp), lambda n: (n, 0, 0, 0)),
        compiler_params=pltpu.CompilerParams(dimension_semantics=("parallel",)),
    )(y, scale, bias)


# ---------------------------------------------------------------------------
# JAX glue: fold BN batch stats into per-channel scale/bias, prep weights.
# ---------------------------------------------------------------------------
def _fold_bn(sums, sqs, gamma, beta, count, eps=1e-5):
    cp = sums.shape[-1]
    s = jnp.sum(sums, axis=(0, 1))
    q = jnp.sum(sqs, axis=(0, 1))
    mean = s / count
    var = jnp.maximum(q / count - mean * mean, 0.0)     # biased var (torch train BN)
    g = jnp.zeros((cp,), jnp.float32).at[:gamma.shape[0]].set(gamma.astype(jnp.float32))
    b = jnp.zeros((cp,), jnp.float32).at[:beta.shape[0]].set(beta.astype(jnp.float32))
    scale = g * lax.rsqrt(var + eps)
    bias = b - mean * scale
    return scale.reshape(1, cp), bias.reshape(1, cp)


def _prep_weight(w, cin_pad, cout_pad):
    """(3,3,Cin,Cout) -> (9*cin_pad, cout_pad) with zero padding (im2col order)."""
    kh, kw, cin, cout = w.shape
    wp = jnp.zeros((kh, kw, cin_pad, cout_pad), jnp.float32)
    wp = wp.at[:, :, :cin, :cout].set(w.astype(jnp.float32))
    return wp.reshape(kh * kw * cin_pad, cout_pad)


def down_forward(x_nchw, params, eps=1e-5):
    """Down(in_channels, out_channels).forward on NCHW input."""
    N, cin, H, W = x_nchw.shape
    assert H % 2 == 0 and W % 2 == 0, "MaxPool2d(2) path assumes even H, W"
    Hp, Wp = H // 2, W // 2
    cmid = params["w1"].shape[-1]
    cout = params["w2"].shape[-1]
    c1p = _round_up(cmid, _LANE)
    c2p = _round_up(cout, _LANE)

    # NCHW -> NHWC -> pool-friendly (N, Hp, 2, Wp, 2*Cin). The reshape is a free
    # row-major re-view; lanes [0:Cin]/[Cin:2Cin] are the even/odd columns.
    x = jnp.transpose(x_nchw, (0, 2, 3, 1)).reshape(N, Hp, 2, Wp, 2 * cin)

    w1 = _prep_weight(params["w1"], cin, c1p)           # (9*Cin, C1p)
    w2 = _prep_weight(params["w2"], c1p, c2p)           # (9*C1p, C2p)

    # TODO(synk): for large images add a row-tile grid axis with a 1-row halo
    # (overlapping pl.Element blocks) so a whole image never has to fit VMEM.

    y1, s1, q1 = pool_conv1(x, w1)
    scale1, bias1 = _fold_bn(s1, q1, params["g1"], params["b1"], N * Hp * Wp, eps)

    y2, s2, q2 = bnrelu_conv2(y1, scale1, bias1, w2)
    scale2, bias2 = _fold_bn(s2, q2, params["g2"], params["b2"], N * Hp * Wp, eps)

    out = bn_relu(y2, scale2, bias2)                    # (N, Hp, Wp, C2p)
    return jnp.transpose(out[..., :cout], (0, 3, 1, 2))  # NHWC -> NCHW


# ---------------------------- pure-JAX reference ----------------------------
def _reference_down(x, w1, w2, g1, b1, g2, b2, eps=1e-5):
    N, C, H, W = x.shape
    xp = x.reshape(N, C, H // 2, 2, W // 2, 2).max(axis=(3, 5))

    def conv(z, w):
        return lax.conv_general_dilated(
            z, jnp.transpose(w, (3, 2, 0, 1)), (1, 1), "SAME",
            dimension_numbers=("NCHW", "OIHW", "NCHW"))

    def bn_r(y, g, b):
        mean = jnp.mean(y, axis=(0, 2, 3), keepdims=True)
        var = jnp.var(y, axis=(0, 2, 3), keepdims=True)
        yn = (y - mean) / jnp.sqrt(var + eps)
        return jnp.maximum(yn * g.reshape(1, -1, 1, 1) + b.reshape(1, -1, 1, 1), 0.0)

    y = bn_r(conv(xp, w1), g1, b1)
    return bn_r(conv(y, w2), g2, b2)


if __name__ == "__main__":
    in_channels, out_channels = 4, 8
    N, H, W = 2, 16, 16

    key = jax.random.PRNGKey(0)
    kx, k1, k2 = jax.random.split(key, 3)

    x = jax.random.normal(kx, (N, in_channels, H, W), jnp.float32)
    params = {
        "w1": jax.random.normal(k1, (3, 3, in_channels, out_channels), jnp.float32) * 0.1,
        "w2": jax.random.normal(k2, (3, 3, out_channels, out_channels), jnp.float32) * 0.1,
        # fresh PyTorch BatchNorm2d init: gamma=1, beta=0
        "g1": jnp.ones((out_channels,), jnp.float32),
        "b1": jnp.zeros((out_channels,), jnp.float32),
        "g2": jnp.ones((out_channels,), jnp.float32),
        "b2": jnp.zeros((out_channels,), jnp.float32),
    }

    out = jax.block_until_ready(down_forward(x, params))
    assert out.shape == (N, out_channels, H // 2, W // 2), out.shape

    ref = jax.block_until_ready(
        _reference_down(x, params["w1"], params["w2"],
                        params["g1"], params["b1"], params["g2"], params["b2"]))
    assert jnp.allclose(out, ref, atol=1e-4, rtol=1e-4), float(jnp.abs(out - ref).max())

    print("KERNEL_OK")
</pallas_src>

<mosaic_0001>
module attributes {stable_mosaic.version = 11 : i64} {
  func.func @_pool_conv_kernel(%arg0: i32, %arg1: memref<1x8x2x8x8xf32, #tpu.memory_space<vmem>>, %arg2: memref<36x128xf32, #tpu.memory_space<vmem>>, %arg3: memref<1x8x8x128xf32, #tpu.memory_space<vmem>>, %arg4: memref<1x1x128xf32, #tpu.memory_space<vmem>>, %arg5: memref<1x1x128xf32, #tpu.memory_space<vmem>>, %arg6: memref<8x8x36xf32, #tpu.memory_space<vmem>>) attributes {dimension_semantics = [#tpu.dimension_semantics<parallel>], iteration_bounds = array<i64: 2>, scalar_prefetch = 0 : i64, scratch_operands = 1 : i64, tpu.core_type = #tpu.core_type<tc>, window_params = [{transform_indices = @transform_0, window_bounds = array<i64: 1, 8, 2, 8, 8>}, {pipeline_mode = #tpu.pipeline_mode<synchronous>, transform_indices = @transform_1, window_bounds = array<i64: 36, 128>}, {transform_indices = @transform_2, window_bounds = array<i64: 1, 8, 8, 128>}, {transform_indices = @transform_3, window_bounds = array<i64: 1, 1, 128>}, {transform_indices = @transform_4, window_bounds = array<i64: 1, 1, 128>}]} {
    %c0 = arith.constant 0 : index
    %c0_0 = arith.constant 0 : index
    %c0_1 = arith.constant 0 : index
    %c0_2 = arith.constant 0 : index
    %c0_3 = arith.constant 0 : index
    %0 = vector.load %arg1[%c0, %c0_0, %c0_1, %c0_2, %c0_3] : memref<1x8x2x8x8xf32, #tpu.memory_space<vmem>>, vector<1x8x2x8x8xf32>
    %1 = vector.shape_cast %0 : vector<1x8x2x8x8xf32> to vector<8x2x8x8xf32>
    %2 = vector.extract_strided_slice %1 {offsets = [0, 0, 0, 0], sizes = [8, 1, 8, 8], strides = [1, 1, 1, 1]} : vector<8x2x8x8xf32> to vector<8x1x8x8xf32>
    %3 = vector.shape_cast %2 : vector<8x1x8x8xf32> to vector<8x8x8xf32>
    %4 = vector.extract_strided_slice %1 {offsets = [0, 1, 0, 0], sizes = [8, 1, 8, 8], strides = [1, 1, 1, 1]} : vector<8x2x8x8xf32> to vector<8x1x8x8xf32>
    %5 = vector.shape_cast %4 : vector<8x1x8x8xf32> to vector<8x8x8xf32>
    %6 = arith.maximumf %3, %5 : vector<8x8x8xf32>
    %7 = vector.extract_strided_slice %6 {offsets = [0, 0, 0], sizes = [8, 8, 4], strides = [1, 1, 1]} : vector<8x8x8xf32> to vector<8x8x4xf32>
    %8 = vector.extract_strided_slice %6 {offsets = [0, 0, 4], sizes = [8, 8, 4], strides = [1, 1, 1]} : vector<8x8x8xf32> to vector<8x8x4xf32>
    %9 = arith.maximumf %7, %8 : vector<8x8x4xf32>
    %cst = arith.constant 0.000000e+00 : f32
    %10 = vector.broadcast %cst : f32 to vector<8x8x36xf32>
    %c0_4 = arith.constant 0 : index
    %c0_5 = arith.constant 0 : index
    %c0_6 = arith.constant 0 : index
    %11 = vector.load %arg6[%c0_4, %c0_5, %c0_6] : memref<8x8x36xf32, #tpu.memory_space<vmem>>, vector<8x8x36xf32>
    tpu.vector_store %arg6[%c0_4, %c0_5, %c0_6], %10 {strides = array<i32>} : memref<8x8x36xf32, #tpu.memory_space<vmem>>, vector<8x8x36xf32>,
    %12 = vector.extract_strided_slice %9 {offsets = [0, 0, 0], sizes = [7, 7, 4], strides = [1, 1, 1]} : vector<8x8x4xf32> to vector<7x7x4xf32>
    %c1 = arith.constant 1 : index
    %c1_7 = arith.constant 1 : index
    %c0_8 = arith.constant 0 : index
    %13 = vector.load %arg6[%c1, %c1_7, %c0_8] : memref<8x8x36xf32, #tpu.memory_space<vmem>>, vector<7x7x4xf32>
    tpu.vector_store %arg6[%c1, %c1_7, %c0_8], %12 {strides = array<i32>} : memref<8x8x36xf32, #tpu.memory_space<vmem>>, vector<7x7x4xf32>,
    %14 = vector.extract_strided_slice %9 {offsets = [0, 0, 0], sizes = [7, 8, 4], strides = [1, 1, 1]} : vector<8x8x4xf32> to vector<7x8x4xf32>
    %c1_9 = arith.constant 1 : index
    %c0_10 = arith.constant 0 : index
    %c4 = arith.constant 4 : index
    %15 = vector.load %arg6[%c1_9, %c0_10, %c4] : memref<8x8x36xf32, #tpu.memory_space<vmem>>, vector<7x8x4xf32>
    tpu.vector_store %arg6[%c1_9, %c0_10, %c4], %14 {strides = array<i32>} : memref<8x8x36xf32, #tpu.memory_space<vmem>>, vector<7x8x4xf32>,
    %16 = vector.extract_strided_slice %9 {offsets = [0, 1, 0], sizes = [7, 7, 4], strides = [1, 1, 1]} : vector<8x8x4xf32> to vector<7x7x4xf32>
    %c1_11 = arith.constant 1 : index
    %c0_12 = arith.constant 0 : index
    %c8 = arith.constant 8 : index
    %17 = vector.load %arg6[%c1_11, %c0_12, %c8] : memref<8x8x36xf32, #tpu.memory_space<vmem>>, vector<7x7x4xf32>
    tpu.vector_store %arg6[%c1_11, %c0_12, %c8], %16 {strides = array<i32>} : memref<8x8x36xf32, #tpu.memory_space<vmem>>, vector<7x7x4xf32>,
    %18 = vector.extract_strided_slice %9 {offsets = [0, 0, 0], sizes = [8, 7, 4], strides = [1, 1, 1]} : vector<8x8x4xf32> to vector<8x7x4xf32>
    %c0_13 = arith.constant 0 : index
    %c1_14 = arith.constant 1 : index
    %c12 = arith.constant 12 : index
    %19 = vector.load %arg6[%c0_13, %c1_14, %c12] : memref<8x8x36xf32, #tpu.memory_space<vmem>>, vector<8x7x4xf32>
    tpu.vector_store %arg6[%c0_13, %c1_14, %c12], %18 {strides = array<i32>} : memref<8x8x36xf32, #tpu.memory_space<vmem>>, vector<8x7x4xf32>,
    %c0_15 = arith.constant 0 : index
    %c0_16 = arith.constant 0 : index
    %c16 = arith.constant 16 : index
    %20 = vector.load %arg6[%c0_15, %c0_16, %c16] : memref<8x8x36xf32, #tpu.memory_space<vmem>>, vector<8x8x4xf32>
    tpu.vector_store %arg6[%c0_15, %c0_16, %c16], %9 {strides = array<i32>} : memref<8x8x36xf32, #tpu.memory_space<vmem>>, vector<8x8x4xf32>,
    %21 = vector.extract_strided_slice %9 {offsets = [0, 1, 0], sizes = [8, 7, 4], strides = [1, 1, 1]} : vector<8x8x4xf32> to vector<8x7x4xf32>
    %c0_17 = arith.constant 0 : index
    %c0_18 = arith.constant 0 : index
    %c20 = arith.constant 20 : index
    %22 = vector.load %arg6[%c0_17, %c0_18, %c20] : memref<8x8x36xf32, #tpu.memory_space<vmem>>, vector<8x7x4xf32>
    tpu.vector_store %arg6[%c0_17, %c0_18, %c20], %21 {strides = array<i32>} : memref<8x8x36xf32, #tpu.memory_space<vmem>>, vector<8x7x4xf32>,
    %23 = vector.extract_strided_slice %9 {offsets = [1, 0, 0], sizes = [7, 7, 4], strides = [1, 1, 1]} : vector<8x8x4xf32> to vector<7x7x4xf32>
    %c0_19 = arith.constant 0 : index
    %c1_20 = arith.constant 1 : index
    %c24 = arith.constant 24 : index
    %24 = vector.load %arg6[%c0_19, %c1_20, %c24] : memref<8x8x36xf32, #tpu.memory_space<vmem>>, vector<7x7x4xf32>
    tpu.vector_store %arg6[%c0_19, %c1_20, %c24], %23 {strides = array<i32>} : memref<8x8x36xf32, #tpu.memory_space<vmem>>, vector<7x7x4xf32>,
    %25 = vector.extract_strided_slice %9 {offsets = [1, 0, 0], sizes = [7, 8, 4], strides = [1, 1, 1]} : vector<8x8x4xf32> to vector<7x8x4xf32>
    %c0_21 = arith.constant 0 : index
    %c0_22 = arith.constant 0 : index
    %c28 = arith.constant 28 : index
    %26 = vector.load %arg6[%c0_21, %c0_22, %c28] : memref<8x8x36xf32, #tpu.memory_space<vmem>>, vector<7x8x4xf32>
    tpu.vector_store %arg6[%c0_21, %c0_22, %c28], %25 {strides = array<i32>} : memref<8x8x36xf32, #tpu.memory_space<vmem>>, vector<7x8x4xf32>,
    %27 = vector.extract_strided_slice %9 {offsets = [1, 1, 0], sizes = [7, 7, 4], strides = [1, 1, 1]} : vector<8x8x4xf32> to vector<7x7x4xf32>
    %c0_23 = arith.constant 0 : index
    %c0_24 = arith.constant 0 : index
    %c32 = arith.constant 32 : index
    %28 = vector.load %arg6[%c0_23, %c0_24, %c32] : memref<8x8x36xf32, #tpu.memory_space<vmem>>, vector<7x7x4xf32>
    tpu.vector_store %arg6[%c0_23, %c0_24, %c32], %27 {strides = array<i32>} : memref<8x8x36xf32, #tpu.memory_space<vmem>>, vector<7x7x4xf32>,
    %c0_25 = arith.constant 0 : index
    %c0_26 = arith.constant 0 : index
    %c0_27 = arith.constant 0 : index
    %29 = vector.load %arg6[%c0_25, %c0_26, %c0_27] : memref<8x8x36xf32, #tpu.memory_space<vmem>>, vector<8x8x36xf32>
    %30 = vector.shape_cast %29 : vector<8x8x36xf32> to vector<64x36xf32>
    %c0_28 = arith.constant 0 : index
    %c0_29 = arith.constant 0 : index
    %31 = vector.load %arg2[%c0_28, %c0_29] : memref<36x128xf32, #tpu.memory_space<vmem>>, vector<36x128xf32>
    %cst_30 = arith.constant dense<0.000000e+00> : vector<64x128xf32>
    %32 = tpu.matmul %30, %31, %cst_30 {dimension_numbers = #tpu.dot_dimension_numbers<[1], [0], [0], [1], [0, 0, 1, 1], [], []>} : vector<64x36xf32>, vector<36x128xf32>, vector<64x128xf32> -> vector<64x128xf32>
    %33 = vector.shape_cast %32 : vector<64x128xf32> to vector<1x8x8x128xf32>
    %c0_31 = arith.constant 0 : index
    %c0_32 = arith.constant 0 : index
    %c0_33 = arith.constant 0 : index
    %c0_34 = arith.constant 0 : index
    %34 = vector.load %arg3[%c0_31, %c0_32, %c0_33, %c0_34] : memref<1x8x8x128xf32, #tpu.memory_space<vmem>>, vector<1x8x8x128xf32>
    tpu.vector_store %arg3[%c0_31, %c0_32, %c0_33, %c0_34], %33 {strides = array<i32>} : memref<1x8x8x128xf32, #tpu.memory_space<vmem>>, vector<1x8x8x128xf32>,
    %cst_35 = arith.constant dense<0.000000e+00> : vector<128xf32>
    %35 = vector.multi_reduction <add>, %32, %cst_35 [0] : vector<64x128xf32> to vector<128xf32>
    %36 = vector.shape_cast %35 : vector<128xf32> to vector<1x128xf32>
    %37 = vector.shape_cast %36 : vector<1x128xf32> to vector<1x1x128xf32>
    %c0_36 = arith.constant 0 : index
    %c0_37 = arith.constant 0 : index
    %c0_38 = arith.constant 0 : index
    %38 = vector.load %arg4[%c0_36, %c0_37, %c0_38] : memref<1x1x128xf32, #tpu.memory_space<vmem>>, vector<1x1x128xf32>
    tpu.vector_store %arg4[%c0_36, %c0_37, %c0_38], %37 {strides = array<i32>} : memref<1x1x128xf32, #tpu.memory_space<vmem>>, vector<1x1x128xf32>,
    %39 = arith.mulf %32, %32 : vector<64x128xf32>
    %cst_39 = arith.constant dense<0.000000e+00> : vector<128xf32>
    %40 = vector.multi_reduction <add>, %39, %cst_39 [0] : vector<64x128xf32> to vector<128xf32>
    %41 = vector.shape_cast %40 : vector<128xf32> to vector<1x128xf32>
    %42 = vector.shape_cast %41 : vector<1x128xf32> to vector<1x1x128xf32>
    %c0_40 = arith.constant 0 : index
    %c0_41 = arith.constant 0 : index
    %c0_42 = arith.constant 0 : index
    %43 = vector.load %arg5[%c0_40, %c0_41, %c0_42] : memref<1x1x128xf32, #tpu.memory_space<vmem>>, vector<1x1x128xf32>
    tpu.vector_store %arg5[%c0_40, %c0_41, %c0_42], %42 {strides = array<i32>} : memref<1x1x128xf32, #tpu.memory_space<vmem>>, vector<1x1x128xf32>,
    return
  }
  func.func @transform_0(%arg0: i32) -> (i32, i32, i32, i32, i32) {
    %c0_i32 = arith.constant 0 : i32
    %c0_i32_0 = arith.constant 0 : i32
    %c0_i32_1 = arith.constant 0 : i32
    %c0_i32_2 = arith.constant 0 : i32
    %c0_i32_3 = arith.constant 0 : i32
    return %arg0, %c0_i32, %c0_i32_0, %c0_i32_1, %c0_i32_2 : i32, i32, i32, i32, i32
  }
  func.func @transform_1(%arg0: i32) -> (i32, i32) {
    %c0_i32 = arith.constant 0 : i32
    %c0_i32_0 = arith.constant 0 : i32
    %c0_i32_1 = arith.constant 0 : i32
    return %c0_i32, %c0_i32_0 : i32, i32
  }
  func.func @transform_2(%arg0: i32) -> (i32, i32, i32, i32) {
    %c0_i32 = arith.constant 0 : i32
    %c0_i32_0 = arith.constant 0 : i32
    %c0_i32_1 = arith.constant 0 : i32
    %c0_i32_2 = arith.constant 0 : i32
    return %arg0, %c0_i32, %c0_i32_0, %c0_i32_1 : i32, i32, i32, i32
  }
  func.func @transform_3(%arg0: i32) -> (i32, i32, i32) {
    %c0_i32 = arith.constant 0 : i32
    %c0_i32_0 = arith.constant 0 : i32
    %c0_i32_1 = arith.constant 0 : i32
    return %arg0, %c0_i32, %c0_i32_0 : i32, i32, i32
  }
  func.func @transform_4(%arg0: i32) -> (i32, i32, i32) {
    %c0_i32 = arith.constant 0 : i32
    %c0_i32_0 = arith.constant 0 : i32
    %c0_i32_1 = arith.constant 0 : i32
    return %arg0, %c0_i32, %c0_i32_0 : i32, i32, i32
  }
}

</mosaic_0001>

<llo_original>
// kernel: tpu_custom_call.1
$region0: #{tpu_custom_call.1}
  #allocation0 [shape = 'u32[]', space=smem, size = 0x4, offset = 0x4, fixed_abs, tag = 'smem constant byte address 0x4 - core index']
  #allocation1 [shape = 'u32[72,128]{1,0:T(1,128)}', space=vmem, size = 0x9000, scoped, tag = 'internal scratch']
  #allocation2 [shape = 'f32[8,8,36]{2,1,0:T(8,128)}', space=vmem, size = 0x8000, scoped, tag = 'scratch operand']
  %s0 = inlined_call_operand.hbm [shape: f32[2,8,2,8,8], index: 0, kind: input, shape index: {}]
  %s1 = inlined_call_operand.hbm [shape: f32[36,128], index: 1, kind: input, shape index: {}]
  %s2 = inlined_call_operand.hbm [shape: f32[2,8,8,128], index: 2, kind: output, shape index: {0}]
  %s3 = inlined_call_operand.hbm [shape: f32[2,1,128], index: 3, kind: output, shape index: {1}]
  %s4 = inlined_call_operand.hbm [shape: f32[2,1,128], index: 4, kind: output, shape index: {2}]
  %5 = xla_tuple %s2, %s3, %s4
  %s6 = sld [smem:[#allocation0]]
  $region65: #{tpu_custom_call.1} parent=0
    _
  %s8 = ssub.s32 1, %s6
  %s9 = scalar_select 0, %s8, %s6
  $region1: #{tpu_custom_call.1} parent=0
    #allocation3 [shape = 'u8[131072]{0}', space=vmem, size = 0x20000, scoped, tag = 'input window, operand 0']
    #allocation4 [shape = 's32[2]{0}', space=sflag, size = 0x8, scoped, tag = 'scoped memory for tpu_custom_call.1']
    #allocation5 [shape = 's32[2]{0}', space=sflag, size = 0x8, scoped, tag = 'scoped memory for tpu_custom_call.1']
    #allocation6 [shape = 'u8[20480]{0}', space=vmem, size = 0x5000, scoped, tag = 'input window, operand 1, single buffered']
    #allocation7 [shape = 's32[1]{0}', space=sflag, size = 0x4, scoped, tag = 'scoped memory for tpu_custom_call.1']
    #allocation8 [shape = 'u8[65536]{0}', space=vmem, size = 0x10000, scoped, tag = 'output window, operand 0']
    #allocation9 [shape = 'u8[1024]{0}', space=vmem, size = 0x400, scoped, tag = 'output window, operand 1']
    #allocation10 [shape = 's32[2]{0}', space=sflag, size = 0x8, scoped, tag = 'scoped memory for tpu_custom_call.1']
    #allocation11 [shape = 'u8[1024]{0}', space=vmem, size = 0x400, scoped, tag = 'output window, operand 2']
    %10 = vsyncpa [#allocation4], 0
    %s11 = scalar_lea.sflag [#allocation4], 1
    %12 = vsyncpa %s11, 0
    %13 = vsyncpa [#allocation7], 0
    %14 = vsyncpa [#allocation5], 0
    %s15 = scalar_lea.sflag [#allocation5], 1
    %16 = vsyncpa %s15, 0
    %17 = vsyncpa [#allocation10], 0
    %s18 = scalar_lea.sflag [#allocation10], 1
    %19 = vsyncpa %s18, 0
    loop: start=0, step=1, limit=4
    $region2: #{tpu_custom_call.1} parent=1 // loop_pre_header
      _
    $region3: #{tpu_custom_call.1} parent=1 // loop_header
      %s21 = sphi 0, %s25
      %p22 = scmp.ge.s32.totalorder %s21, 4
      %s31 = sphi 0, %s33
      %s34 = sphi 0, %s31
      %s35 = sphi 0, %s34
      %s51 = sphi 0, %s35
      %s55 = sphi 0, %s55
      %s57 = sphi 0, %s55
      %s58 = sphi 0, %s57
      %s72 = sphi 0, %s58
      %s78 = sphi 0, %s80
      %s81 = sphi 0, %s78
      %s82 = sphi 0, %s81
      %s98 = sphi 0, %s82
      %s104 = sphi 0, %s106
      %s107 = sphi 0, %s104
      %s108 = sphi 0, %s107
      %s124 = sphi 0, %s108
      %s130 = sphi 0, %s132
      %s133 = sphi 0, %s130
      %s134 = sphi 0, %s133
      %s150 = sphi 0, %s134
    $region4: #{tpu_custom_call.1} parent=1 // loop_header_branch
      %24 = sbr.rel (%p22) target = $region8
    $region5: #{tpu_custom_call.1} parent=1 // loop_body
      %s26 = ssub.s32 %s21, 1
      %s27 = ssub.s32 %s21, 2
      %s28 = sadd.s32 %s21, 1
      %s29 = ssub.s32 %s21, %s28
      %p30 = scmp.eq.s32.totalorder %s29, 0
      %s32 = sadd.s32 %s31, 1
      %s33 = scalar_select %p30, %s31, %s32
      %p36 = pneg %p30
      %p37 = scmp.eq.s32.totalorder %s21, 1
      %p38 = por %p36, %p37
      %p39 = scmp.ne.s32.totalorder %s31, %s34
      %p40 = scmp.eq.s32.totalorder %s21, 0
      %p41 = por %p39, %p40
      %p42 = scmp.ne.s32.totalorder %s31, %s34
      %p43 = scmp.eq.s32.totalorder %s26, 1
      %p44 = por %p42, %p43
      %p45 = scmp.ne.s32.totalorder %s34, %s35
      %p46 = scmp.eq.s32.totalorder %s26, 0
      %p47 = por %p45, %p46
      %p48 = scmp.ne.s32.totalorder %s34, %s35
      %p49 = scmp.eq.s32.totalorder %s27, 1
      %p50 = por %p48, %p49
      %p52 = scmp.ne.s32.totalorder %s35, %s51
      %p53 = scmp.eq.s32.totalorder %s27, 0
      %p54 = por %p52, %p53
      %s56 = sadd.s32 %s55, 1
      %p59 = scmp.eq.s32.totalorder %s21, 1
      %p60 = scmp.ne.s32.totalorder %s55, %s57
      %p61 = scmp.eq.s32.totalorder %s21, 0
      %p62 = por %p60, %p61
      %p63 = scmp.ne.s32.totalorder %s55, %s57
      %p64 = scmp.eq.s32.totalorder %s26, 1
      %p65 = por %p63, %p64
      %p66 = scmp.ne.s32.totalorder %s57, %s58
      %p67 = scmp.eq.s32.totalorder %s26, 0
      %p68 = por %p66, %p67
      %p69 = scmp.ne.s32.totalorder %s57, %s58
      %p70 = scmp.eq.s32.totalorder %s27, 1
      %p71 = por %p69, %p70
      %p73 = scmp.ne.s32.totalorder %s58, %s72
      %p74 = scmp.eq.s32.totalorder %s27, 0
      %p75 = por %p73, %p74
      %s76 = ssub.s32 %s21, %s28
      %p77 = scmp.eq.s32.totalorder %s76, 0
      %s79 = sadd.s32 %s78, 1
      %s80 = scalar_select %p77, %s78, %s79
      %p83 = pneg %p77
      %p84 = scmp.eq.s32.totalorder %s21, 1
      %p85 = por %p83, %p84
      %p86 = scmp.ne.s32.totalorder %s78, %s81
      %p87 = scmp.eq.s32.totalorder %s21, 0
      %p88 = por %p86, %p87
      %p89 = scmp.ne.s32.totalorder %s78, %s81
      %p90 = scmp.eq.s32.totalorder %s26, 1
      %p91 = por %p89, %p90
      %p92 = scmp.ne.s32.totalorder %s81, %s82
      %p93 = scmp.eq.s32.totalorder %s26, 0
      %p94 = por %p92, %p93
      %p95 = scmp.ne.s32.totalorder %s81, %s82
      %p96 = scmp.eq.s32.totalorder %s27, 1
      %p97 = por %p95, %p96
      %p99 = scmp.ne.s32.totalorder %s82, %s98
      %p100 = scmp.eq.s32.totalorder %s27, 0
      %p101 = por %p99, %p100
      %s102 = ssub.s32 %s21, %s28
      %p103 = scmp.eq.s32.totalorder %s102, 0
      %s105 = sadd.s32 %s104, 1
      %s106 = scalar_select %p103, %s104, %s105
      %p109 = pneg %p103
      %p110 = scmp.eq.s32.totalorder %s21, 1
      %p111 = por %p109, %p110
      %p112 = scmp.ne.s32.totalorder %s104, %s107
      %p113 = scmp.eq.s32.totalorder %s21, 0
      %p114 = por %p112, %p113
      %p115 = scmp.ne.s32.totalorder %s104, %s107
      %p116 = scmp.eq.s32.totalorder %s26, 1
      %p117 = por %p115, %p116
      %p118 = scmp.ne.s32.totalorder %s107, %s108
      %p119 = scmp.eq.s32.totalorder %s26, 0
      %p120 = por %p118, %p119
      %p121 = scmp.ne.s32.totalorder %s107, %s108
      %p122 = scmp.eq.s32.totalorder %s27, 1
      %p123 = por %p121, %p122
      %p125 = scmp.ne.s32.totalorder %s108, %s124
      %p126 = scmp.eq.s32.totalorder %s27, 0
      %p127 = por %p125, %p126
      %s128 = ssub.s32 %s21, %s28
      %p129 = scmp.eq.s32.totalorder %s128, 0
      %s131 = sadd.s32 %s130, 1
      %s132 = scalar_select %p129, %s130, %s131
      %p135 = pneg %p129
      %p136 = scmp.eq.s32.totalorder %s21, 1
      %p137 = por %p135, %p136
      %p138 = scmp.ne.s32.totalorder %s130, %s133
      %p139 = scmp.eq.s32.totalorder %s21, 0
      %p140 = por %p138, %p139
      %p141 = scmp.ne.s32.totalorder %s130, %s133
      %p142 = scmp.eq.s32.totalorder %s26, 1
      %p143 = por %p141, %p142
      %p144 = scmp.ne.s32.totalorder %s133, %s134
      %p145 = scmp.eq.s32.totalorder %s26, 0
      %p146 = por %p144, %p145
      %p147 = scmp.ne.s32.totalorder %s133, %s134
      %p148 = scmp.eq.s32.totalorder %s27, 1
      %p149 = por %p147, %p148
      %p151 = scmp.ne.s32.totalorder %s134, %s150
      %p152 = scmp.eq.s32.totalorder %s27, 0
      %p153 = por %p151, %p152
      %p154 = scmp.le.s32.totalorder 1, %s21
      %p155 = scmp.lt.s32.totalorder %s21, 3
      %p156 = pnand %p154, %p155
      %p157 = pneg %p156
      // Predicated region
      $region9: #{tpu_custom_call.1} parent=5 // pred_check
        _
      $region10: #{tpu_custom_call.1} parent=5 // pred_check_branch
        %159 = sbr.rel (%p156) target = $region12
      $region11: #{tpu_custom_call.1} parent=5 // pred_region
        %s160 = ssub.s32 %s21, 1
        // Predicated region
        $region13: #{tpu_custom_call.1} parent=11 // pred_check
          %p161 = pneg %p68
        $region14: #{tpu_custom_call.1} parent=11 // pred_check_branch
          %163 = sbr.rel (%p161) target = $region16
        $region15: #{tpu_custom_call.1} parent=11 // pred_region
          %165 = vsyncadd [#allocation7], 0
          %s166 = sshll.u32 %s1, 4
          %s167 = int_to_ptr.hbm [resolvable:$true] %s166
          %s168 = sshll.u32 [#allocation6], 4
          %s169 = int_to_ptr.vmem [resolvable:$true] %s168
          %174 = dma.hbm_to_vmem [thread:$0]  %s167, 640, %s169, [#allocation7], 128, 128, 8
        $region16: #{tpu_custom_call.1} parent=11 // pred_fallthru
          _
      $region12: #{tpu_custom_call.1} parent=5 // pred_fallthru
        _
      %p175 = scmp.lt.s32.totalorder %s21, 2
      // Predicated region
      $region17: #{tpu_custom_call.1} parent=5 // pred_check
        %p176 = pneg %p175
      $region18: #{tpu_custom_call.1} parent=5 // pred_check_branch
        %178 = sbr.rel (%p176) target = $region20
      $region19: #{tpu_custom_call.1} parent=5 // pred_region
        // Predicated region
        $region21: #{tpu_custom_call.1} parent=19 // pred_check
          %p179 = pneg %p41
        $region22: #{tpu_custom_call.1} parent=19 // pred_check_branch
          %181 = sbr.rel (%p179) target = $region24
        $region23: #{tpu_custom_call.1} parent=19 // pred_region
          %s182 = sand.u32 %s31, 1
          %s183 = scalar_lea.sflag [#allocation4], %s182
          %s184 = sand.u32 %s31, 1
          %s185 = smul.addr %s184, 128
          %s186 = scalar_lea.vmem [#allocation3], %s185
          %188 = vsyncadd %s183, 0
          %s189 = smul.addr %s21, 16
          %s190 = smul.addr %s189, 8
          %s191 = scalar_lea.hbm %s0, %s190
          %s192 = sshll.u32 %s191, 4
          %s193 = int_to_ptr.hbm [resolvable:$true] %s192
          %s194 = sshll.u32 %s186, 4
          %s195 = int_to_ptr.vmem [resolvable:$true] %s194
          %200 = dma.hbm_to_vmem [thread:$0]  %s193, 2048, %s195, %s183, 128, 128, 8
        $region24: #{tpu_custom_call.1} parent=19 // pred_fallthru
          _
      $region20: #{tpu_custom_call.1} parent=5 // pred_fallthru
        _
      %p201 = scmp.le.s32.totalorder 1, %s21
      %p202 = scmp.lt.s32.totalorder %s21, 3
      %p203 = pnand %p201, %p202
      %p204 = pneg %p203
      // Predicated region
      $region25: #{tpu_custom_call.1} parent=5 // pred_check
        _
      $region26: #{tpu_custom_call.1} parent=5 // pred_check_branch
        %206 = sbr.rel (%p203) target = $region28
      $region27: #{tpu_custom_call.1} parent=5 // pred_region
        %s207 = ssub.s32 %s21, 1
        %s208 = sand.u32 %s34, 1
        %s209 = scalar_lea.sflag [#allocation4], %s208
        %s210 = sand.u32 %s34, 1
        %s211 = smul.addr %s210, 128
        %s212 = scalar_lea.vmem [#allocation3], %s211
        // Predicated region
        $region29: #{tpu_custom_call.1} parent=27 // pred_check
          %p213 = pneg %p47
        $region30: #{tpu_custom_call.1} parent=27 // pred_check_branch
          %215 = sbr.rel (%p213) target = $region32
        $region31: #{tpu_custom_call.1} parent=27 // pred_region
          %217 = dma.done %s209, 2048
        $region32: #{tpu_custom_call.1} parent=27 // pred_fallthru
          _
        // Predicated region
        $region33: #{tpu_custom_call.1} parent=27 // pred_check
          %p218 = pneg %p68
        $region34: #{tpu_custom_call.1} parent=27 // pred_check_branch
          %220 = sbr.rel (%p218) target = $region36
        $region35: #{tpu_custom_call.1} parent=27 // pred_region
          %222 = dma.done [#allocation7], 640
        $region36: #{tpu_custom_call.1} parent=27 // pred_fallthru
          _
        %s223 = sand.u32 %s34, 1
        %s224 = scalar_lea.sflag [#allocation4], %s223
        %s225 = sand.u32 %s34, 1
        %s226 = smul.addr %s225, 128
        %s227 = scalar_lea.vmem [#allocation3], %s226
        %p228 = pneg %p47
        %p229 = pneg %p44
        %p230 = pneg %p68
        %p231 = pneg %p65
        %p232 = pneg %p94
        %p233 = pneg %p91
        %s234 = sand.u32 %s81, 1
        %s235 = scalar_lea.sflag [#allocation5], %s234
        %s236 = sand.u32 %s81, 1
        %s237 = smul.addr %s236, 64
        %s238 = scalar_lea.vmem [#allocation8], %s237
        %p239 = pneg %p120
        %p240 = pneg %p117
        %s241 = sand.u32 %s26, 1
        %s242 = scalar_lea.sflag [#allocation10], %s241
        %s243 = sand.u32 %s107, 1
        %s244 = scalar_lea.vmem [#allocation9], %s243
        %p245 = pneg %p146
        %p246 = pneg %p143
        %s247 = sand.u32 %s26, 1
        %s248 = scalar_lea.sflag [#allocation10], %s247
        %s249 = sand.u32 %s133, 1
        %s250 = scalar_lea.vmem [#allocation11], %s249
        %v251 = vld [vmem:[%s212] sm:$0xff]
        %v252 = vld [vmem:[%s212 + $0x8] sm:$0xff]
        %v253 = vld [vmem:[%s212 + $0x10] sm:$0xff]
        %v254 = vld [vmem:[%s212 + $0x18] sm:$0xff]
        %v255 = vld [vmem:[%s212 + $0x20] sm:$0xff]
        %v256 = vld [vmem:[%s212 + $0x28] sm:$0xff]
        %v257 = vld [vmem:[%s212 + $0x30] sm:$0xff]
        %v258 = vld [vmem:[%s212 + $0x38] sm:$0xff]
        %v259 = vld [vmem:[%s212 + $0x40] sm:$0xff]
        %v260 = vld [vmem:[%s212 + $0x48] sm:$0xff]
        %v261 = vld [vmem:[%s212 + $0x50] sm:$0xff]
        %v262 = vld [vmem:[%s212 + $0x58] sm:$0xff]
        %v263 = vld [vmem:[%s212 + $0x60] sm:$0xff]
        %v264 = vld [vmem:[%s212 + $0x68] sm:$0xff]
        %v265 = vld [vmem:[%s212 + $0x70] sm:$0xff]
        %v266 = vld [vmem:[%s212 + $0x78] sm:$0xff]
        %v267 = vmax.f32 %v251, %v252
        %v268 = vmax.f32 %v253, %v254
        %v269 = vmax.f32 %v255, %v256
        %v270 = vmax.f32 %v257, %v258
        %v271 = vmax.f32 %v259, %v260
        %v272 = vmax.f32 %v261, %v262
        %v273 = vmax.f32 %v263, %v264
        %v274 = vmax.f32 %v265, %v266
        %283 = vrot.lane.b32.xlu0 %v267, 124
        %v284 = vpop.permute.xlu0 %283
        %285 = vrot.lane.b32.xlu0 %v268, 124
        %v286 = vpop.permute.xlu0 %285
        %287 = vrot.lane.b32.xlu0 %v269, 124
        %v288 = vpop.permute.xlu0 %287
        %289 = vrot.lane.b32.xlu0 %v270, 124
        %v290 = vpop.permute.xlu0 %289
        %291 = vrot.lane.b32.xlu0 %v271, 124
        %v292 = vpop.permute.xlu0 %291
        %293 = vrot.lane.b32.xlu0 %v272, 124
        %v294 = vpop.permute.xlu0 %293
        %295 = vrot.lane.b32.xlu0 %v273, 124
        %v296 = vpop.permute.xlu0 %295
        %297 = vrot.lane.b32.xlu0 %v274, 124
        %v298 = vpop.permute.xlu0 %297
        %v307 = vmax.f32 %v267, %v284
        %v308 = vmax.f32 %v268, %v286
        %v309 = vmax.f32 %v269, %v288
        %v310 = vmax.f32 %v270, %v290
        %v311 = vmax.f32 %v271, %v292
        %v312 = vmax.f32 %v272, %v294
        %v313 = vmax.f32 %v273, %v296
        %v314 = vmax.f32 %v274, %v298
        %vm315 = vcmask 293888
        %316 = vst.msk [vmem:[#allocation2] sm:$0xff] %vm315, 0.0
        %317 = vst.msk [vmem:[#allocation2 + $0x8] sm:$0xff] %vm315, 0.0
        %318 = vst.msk [vmem:[#allocation2 + $0x10] sm:$0xff] %vm315, 0.0
        %319 = vst.msk [vmem:[#allocation2 + $0x18] sm:$0xff] %vm315, 0.0
        %320 = vst.msk [vmem:[#allocation2 + $0x20] sm:$0xff] %vm315, 0.0
        %321 = vst.msk [vmem:[#allocation2 + $0x28] sm:$0xff] %vm315, 0.0
        %322 = vst.msk [vmem:[#allocation2 + $0x30] sm:$0xff] %vm315, 0.0
        %323 = vst.msk [vmem:[#allocation2 + $0x38] sm:$0xff] %vm315, 0.0
        %s324 = scalar_lea.vmem [#allocation2], 8
        %vm325 = vcmask 30720
        %326 = vst.msk [vmem:[%s324 + $0x1] sm:$0x7f] %vm325, %v307
        %327 = vst.msk [vmem:[%s324 + $0x9] sm:$0x7f] %vm325, %v308
        %328 = vst.msk [vmem:[%s324 + $0x11] sm:$0x7f] %vm325, %v309
        %329 = vst.msk [vmem:[%s324 + $0x19] sm:$0x7f] %vm325, %v310
        %330 = vst.msk [vmem:[%s324 + $0x21] sm:$0x7f] %vm325, %v311
        %331 = vst.msk [vmem:[%s324 + $0x29] sm:$0x7f] %vm325, %v312
        %332 = vst.msk [vmem:[%s324 + $0x31] sm:$0x7f] %vm325, %v313
        %340 = vrot.lane.b32.xlu0 %v307, 4
        %v341 = vpop.permute.xlu0 %340
        %342 = vrot.lane.b32.xlu0 %v308, 4
        %v343 = vpop.permute.xlu0 %342
        %344 = vrot.lane.b32.xlu0 %v309, 4
        %v345 = vpop.permute.xlu0 %344
        %346 = vrot.lane.b32.xlu0 %v310, 4
        %v347 = vpop.permute.xlu0 %346
        %348 = vrot.lane.b32.xlu0 %v311, 4
        %v349 = vpop.permute.xlu0 %348
        %350 = vrot.lane.b32.xlu0 %v312, 4
        %v351 = vpop.permute.xlu0 %350
        %352 = vrot.lane.b32.xlu0 %v313, 4
        %v353 = vpop.permute.xlu0 %352
        %vm361 = vcmask 64544
        %362 = vst.msk [vmem:[%s324] sm:$0xff] %vm361, %v341
        %363 = vst.msk [vmem:[%s324 + $0x8] sm:$0xff] %vm361, %v343
        %364 = vst.msk [vmem:[%s324 + $0x10] sm:$0xff] %vm361, %v345
        %365 = vst.msk [vmem:[%s324 + $0x18] sm:$0xff] %vm361, %v347
        %366 = vst.msk [vmem:[%s324 + $0x20] sm:$0xff] %vm361, %v349
        %367 = vst.msk [vmem:[%s324 + $0x28] sm:$0xff] %vm361, %v351
        %368 = vst.msk [vmem:[%s324 + $0x30] sm:$0xff] %vm361, %v353
        %369 = vrot.lane.b32.xlu0 %v307, 8
        %v370 = vpop.permute.xlu0 %369
        %371 = vrot.lane.b32.xlu0 %v308, 8
        %v372 = vpop.permute.xlu0 %371
        %373 = vrot.lane.b32.xlu0 %v309, 8
        %v374 = vpop.permute.xlu0 %373
        %375 = vrot.lane.b32.xlu0 %v310, 8
        %v376 = vpop.permute.xlu0 %375
        %377 = vrot.lane.b32.xlu0 %v311, 8
        %v378 = vpop.permute.xlu0 %377
        %379 = vrot.lane.b32.xlu0 %v312, 8
        %v380 = vpop.permute.xlu0 %379
        %381 = vrot.lane.b32.xlu0 %v313, 8
        %v382 = vpop.permute.xlu0 %381
        %vm390 = vcmask 97345
        %391 = vst.msk [vmem:[%s324 - $0x1] sm:$0xfe] %vm390, %v370
        %392 = vst.msk [vmem:[%s324 + $0x7] sm:$0xfe] %vm390, %v372
        %393 = vst.msk [vmem:[%s324 + $0xf] sm:$0xfe] %vm390, %v374
        %394 = vst.msk [vmem:[%s324 + $0x17] sm:$0xfe] %vm390, %v376
        %395 = vst.msk [vmem:[%s324 + $0x1f] sm:$0xfe] %vm390, %v378
        %396 = vst.msk [vmem:[%s324 + $0x27] sm:$0xfe] %vm390, %v380
        %397 = vst.msk [vmem:[%s324 + $0x2f] sm:$0xfe] %vm390, %v382
        %399 = vrot.lane.b32.xlu0 %v307, 12
        %v400 = vpop.permute.xlu0 %399
        %401 = vrot.lane.b32.xlu0 %v308, 12
        %v402 = vpop.permute.xlu0 %401
        %403 = vrot.lane.b32.xlu0 %v309, 12
        %v404 = vpop.permute.xlu0 %403
        %405 = vrot.lane.b32.xlu0 %v310, 12
        %v406 = vpop.permute.xlu0 %405
        %407 = vrot.lane.b32.xlu0 %v311, 12
        %v408 = vpop.permute.xlu0 %407
        %409 = vrot.lane.b32.xlu0 %v312, 12
        %v410 = vpop.permute.xlu0 %409
        %411 = vrot.lane.b32.xlu0 %v313, 12
        %v412 = vpop.permute.xlu0 %411
        %413 = vrot.lane.b32.xlu0 %v314, 12
        %v414 = vpop.permute.xlu0 %413
        %vm423 = vcmask 129120
        %424 = vst.msk [vmem:[#allocation2 + $0x1] sm:$0x7f] %vm423, %v400
        %425 = vst.msk [vmem:[#allocation2 + $0x9] sm:$0x7f] %vm423, %v402
        %426 = vst.msk [vmem:[#allocation2 + $0x11] sm:$0x7f] %vm423, %v404
        %427 = vst.msk [vmem:[#allocation2 + $0x19] sm:$0x7f] %vm423, %v406
        %428 = vst.msk [vmem:[#allocation2 + $0x21] sm:$0x7f] %vm423, %v408
        %429 = vst.msk [vmem:[#allocation2 + $0x29] sm:$0x7f] %vm423, %v410
        %430 = vst.msk [vmem:[#allocation2 + $0x31] sm:$0x7f] %vm423, %v412
        %431 = vst.msk [vmem:[#allocation2 + $0x39] sm:$0x7f] %vm423, %v414
        %432 = vrot.lane.b32.xlu0 %v307, 16
        %v433 = vpop.permute.xlu0 %432
        %434 = vrot.lane.b32.xlu0 %v308, 16
        %v435 = vpop.permute.xlu0 %434
        %436 = vrot.lane.b32.xlu0 %v309, 16
        %v437 = vpop.permute.xlu0 %436
        %438 = vrot.lane.b32.xlu0 %v310, 16
        %v439 = vpop.permute.xlu0 %438
        %440 = vrot.lane.b32.xlu0 %v311, 16
        %v441 = vpop.permute.xlu0 %440
        %442 = vrot.lane.b32.xlu0 %v312, 16
        %v443 = vpop.permute.xlu0 %442
        %444 = vrot.lane.b32.xlu0 %v313, 16
        %v445 = vpop.permute.xlu0 %444
        %446 = vrot.lane.b32.xlu0 %v314, 16
        %v447 = vpop.permute.xlu0 %446
        %vm456 = vcmask 162944
        %457 = vst.msk [vmem:[#allocation2] sm:$0xff] %vm456, %v433
        %458 = vst.msk [vmem:[#allocation2 + $0x8] sm:$0xff] %vm456, %v435
        %459 = vst.msk [vmem:[#allocation2 + $0x10] sm:$0xff] %vm456, %v437
        %460 = vst.msk [vmem:[#allocation2 + $0x18] sm:$0xff] %vm456, %v439
        %461 = vst.msk [vmem:[#allocation2 + $0x20] sm:$0xff] %vm456, %v441
        %462 = vst.msk [vmem:[#allocation2 + $0x28] sm:$0xff] %vm456, %v443
        %463 = vst.msk [vmem:[#allocation2 + $0x30] sm:$0xff] %vm456, %v445
        %464 = vst.msk [vmem:[#allocation2 + $0x38] sm:$0xff] %vm456, %v447
        %465 = vrot.lane.b32.xlu0 %v307, 20
        %v466 = vpop.permute.xlu0 %465
        %467 = vrot.lane.b32.xlu0 %v308, 20
        %v468 = vpop.permute.xlu0 %467
        %469 = vrot.lane.b32.xlu0 %v309, 20
        %v470 = vpop.permute.xlu0 %469
        %471 = vrot.lane.b32.xlu0 %v310, 20
        %v472 = vpop.permute.xlu0 %471
        %473 = vrot.lane.b32.xlu0 %v311, 20
        %v474 = vpop.permute.xlu0 %473
        %475 = vrot.lane.b32.xlu0 %v312, 20
        %v476 = vpop.permute.xlu0 %475
        %477 = vrot.lane.b32.xlu0 %v313, 20
        %v478 = vpop.permute.xlu0 %477
        %479 = vrot.lane.b32.xlu0 %v314, 20
        %v480 = vpop.permute.xlu0 %479
        %vm489 = vcmask 195745
        %490 = vst.msk [vmem:[#allocation2 - $0x1] sm:$0xfe] %vm489, %v466
        %491 = vst.msk [vmem:[#allocation2 + $0x7] sm:$0xfe] %vm489, %v468
        %492 = vst.msk [vmem:[#allocation2 + $0xf] sm:$0xfe] %vm489, %v470
        %493 = vst.msk [vmem:[#allocation2 + $0x17] sm:$0xfe] %vm489, %v472
        %494 = vst.msk [vmem:[#allocation2 + $0x1f] sm:$0xfe] %vm489, %v474
        %495 = vst.msk [vmem:[#allocation2 + $0x27] sm:$0xfe] %vm489, %v476
        %496 = vst.msk [vmem:[#allocation2 + $0x2f] sm:$0xfe] %vm489, %v478
        %497 = vst.msk [vmem:[#allocation2 + $0x37] sm:$0xfe] %vm489, %v480
        %498 = vrot.lane.b32.xlu0 %v308, 24
        %v499 = vpop.permute.xlu0 %498
        %500 = vrot.lane.b32.xlu0 %v309, 24
        %v501 = vpop.permute.xlu0 %500
        %502 = vrot.lane.b32.xlu0 %v310, 24
        %v503 = vpop.permute.xlu0 %502
        %504 = vrot.lane.b32.xlu0 %v311, 24
        %v505 = vpop.permute.xlu0 %504
        %506 = vrot.lane.b32.xlu0 %v312, 24
        %v507 = vpop.permute.xlu0 %506
        %508 = vrot.lane.b32.xlu0 %v313, 24
        %v509 = vpop.permute.xlu0 %508
        %510 = vrot.lane.b32.xlu0 %v314, 24
        %v511 = vpop.permute.xlu0 %510
        %vm519 = vcmask 227520
        %520 = vst.msk [vmem:[#allocation2 + $0x1] sm:$0x7f] %vm519, %v499
        %521 = vst.msk [vmem:[#allocation2 + $0x9] sm:$0x7f] %vm519, %v501
        %522 = vst.msk [vmem:[#allocation2 + $0x11] sm:$0x7f] %vm519, %v503
        %523 = vst.msk [vmem:[#allocation2 + $0x19] sm:$0x7f] %vm519, %v505
        %524 = vst.msk [vmem:[#allocation2 + $0x21] sm:$0x7f] %vm519, %v507
        %525 = vst.msk [vmem:[#allocation2 + $0x29] sm:$0x7f] %vm519, %v509
        %526 = vst.msk [vmem:[#allocation2 + $0x31] sm:$0x7f] %vm519, %v511
        %527 = vrot.lane.b32.xlu0 %v308, 28
        %v528 = vpop.permute.xlu0 %527
        %529 = vrot.lane.b32.xlu0 %v309, 28
        %v530 = vpop.permute.xlu0 %529
        %531 = vrot.lane.b32.xlu0 %v310, 28
        %v532 = vpop.permute.xlu0 %531
        %533 = vrot.lane.b32.xlu0 %v311, 28
        %v534 = vpop.permute.xlu0 %533
        %535 = vrot.lane.b32.xlu0 %v312, 28
        %v536 = vpop.permute.xlu0 %535
        %537 = vrot.lane.b32.xlu0 %v313, 28
        %v538 = vpop.permute.xlu0 %537
        %539 = vrot.lane.b32.xlu0 %v314, 28
        %v540 = vpop.permute.xlu0 %539
        %vm548 = vcmask 261344
        %549 = vst.msk [vmem:[#allocation2] sm:$0xff] %vm548, %v528
        %550 = vst.msk [vmem:[#allocation2 + $0x8] sm:$0xff] %vm548, %v530
        %551 = vst.msk [vmem:[#allocation2 + $0x10] sm:$0xff] %vm548, %v532
        %552 = vst.msk [vmem:[#allocation2 + $0x18] sm:$0xff] %vm548, %v534
        %553 = vst.msk [vmem:[#allocation2 + $0x20] sm:$0xff] %vm548, %v536
        %554 = vst.msk [vmem:[#allocation2 + $0x28] sm:$0xff] %vm548, %v538
        %555 = vst.msk [vmem:[#allocation2 + $0x30] sm:$0xff] %vm548, %v540
        %556 = vrot.lane.b32.xlu0 %v308, 32
        %v557 = vpop.permute.xlu0 %556
        %558 = vrot.lane.b32.xlu0 %v309, 32
        %v559 = vpop.permute.xlu0 %558
        %560 = vrot.lane.b32.xlu0 %v310, 32
        %v561 = vpop.permute.xlu0 %560
        %562 = vrot.lane.b32.xlu0 %v311, 32
        %v563 = vpop.permute.xlu0 %562
        %564 = vrot.lane.b32.xlu0 %v312, 32
        %v565 = vpop.permute.xlu0 %564
        %566 = vrot.lane.b32.xlu0 %v313, 32
        %v567 = vpop.permute.xlu0 %566
        %568 = vrot.lane.b32.xlu0 %v314, 32
        %v569 = vpop.permute.xlu0 %568
        %vm577 = vcmask 294145
        %578 = vst.msk [vmem:[#allocation2 - $0x1] sm:$0xfe] %vm577, %v557
        %579 = vst.msk [vmem:[#allocation2 + $0x7] sm:$0xfe] %vm577, %v559
        %580 = vst.msk [vmem:[#allocation2 + $0xf] sm:$0xfe] %vm577, %v561
        %581 = vst.msk [vmem:[#allocation2 + $0x17] sm:$0xfe] %vm577, %v563
        %582 = vst.msk [vmem:[#allocation2 + $0x1f] sm:$0xfe] %vm577, %v565
        %583 = vst.msk [vmem:[#allocation2 + $0x27] sm:$0xfe] %vm577, %v567
        %584 = vst.msk [vmem:[#allocation2 + $0x2f] sm:$0xfe] %vm577, %v569
        %v585 = vld [vmem:[#allocation2] sm:$0xff]
        %v586 = vld [vmem:[#allocation2 + $0x8] sm:$0xff]
        %v587 = vld [vmem:[#allocation2 + $0x10] sm:$0xff]
        %v588 = vld [vmem:[#allocation2 + $0x18] sm:$0xff]
        %v589 = vld [vmem:[#allocation2 + $0x20] sm:$0xff]
        %v590 = vld [vmem:[#allocation2 + $0x28] sm:$0xff]
        %v591 = vld [vmem:[#allocation2 + $0x30] sm:$0xff]
        %v592 = vld [vmem:[#allocation2 + $0x38] sm:$0xff]
        %v593 = vld [vmem:[#allocation6] sm:$0xff]
        %v594 = vld [vmem:[#allocation6 + $0x8] sm:$0xff]
        %v595 = vld [vmem:[#allocation6 + $0x10] sm:$0xff]
        %v596 = vld [vmem:[#allocation6 + $0x18] sm:$0xff]
        %v597 = vld [vmem:[#allocation6 + $0x20] sm:$0xf]
        %v599 = vsel %vm315, %v585, 0
        %v602 = vsel %vm315, %v586, 0
        %v605 = vsel %vm315, %v587, 0
        %v608 = vsel %vm315, %v588, 0
        %v611 = vsel %vm315, %v589, 0
        %v614 = vsel %vm315, %v590, 0
        %v617 = vsel %vm315, %v591, 0
        %v620 = vsel %vm315, %v592, 0
        %vm622 = vcmask 1043456
        %v624 = vsel %vm622, %v597, 0
        %626 = vmatpush.msra.mxu0 0.0
        %627 = vmatpush.msra.mxu0 0.0
        %628 = vmatpush.msra.mxu0 0.0
        %629 = vmatpush.msra.mxu0 0.0
        %630 = vmatpush.msra.mxu0 0.0
        %631 = vmatpush.msra.mxu0 0.0
        %632 = vmatpush.msra.mxu0 0.0
        %633 = vmatpush.msra.mxu0 0.0
        %634 = vmatpush.msra.mxu0 0.0
        %635 = vmatpush.msra.mxu0 0.0
        %636 = vmatpush.msra.mxu0 0.0
        %637 = vmatpush.msra.mxu0 %v624
        %638 = vmatpush.msra.mxu0 %v596
        %639 = vmatpush.msra.mxu0 %v595
        %640 = vmatpush.msra.mxu0 %v594
        %641 = vmatpush.msra.mxu0 %v593
        %642 = vmatmul.f32.gmra.mxu0 %v599
        %v643 = vpop.f32.mrf.mxu0
        %v644 = vadd.f32 0.0, %v643
        %645 = vmatmul.f32.gmra.mxu0 %v602
        %v646 = vpop.f32.mrf.mxu0
        %v647 = vadd.f32 0.0, %v646
        %648 = vmatmul.f32.gmra.mxu0 %v605
        %v649 = vpop.f32.mrf.mxu0
        %v650 = vadd.f32 0.0, %v649
        %651 = vmatmul.f32.gmra.mxu0 %v608
        %v652 = vpop.f32.mrf.mxu0
        %v653 = vadd.f32 0.0, %v652
        %654 = vmatmul.f32.gmra.mxu0 %v611
        %v655 = vpop.f32.mrf.mxu0
        %v656 = vadd.f32 0.0, %v655
        %657 = vmatmul.f32.gmra.mxu0 %v614
        %v658 = vpop.f32.mrf.mxu0
        %v659 = vadd.f32 0.0, %v658
        %660 = vmatmul.f32.gmra.mxu0 %v617
        %v661 = vpop.f32.mrf.mxu0
        %v662 = vadd.f32 0.0, %v661
        %663 = vmatmul.f32.gmra.mxu0 %v620
        %v664 = vpop.f32.mrf.mxu0
        %v665 = vadd.f32 0.0, %v664
        %666 = vdwg.mxu0
        %667 = vst [vmem:[%s238] sm:$0xff] %v644
        %668 = vst [vmem:[%s238 + $0x8] sm:$0xff] %v647
        %669 = vst [vmem:[%s238 + $0x10] sm:$0xff] %v650
        %670 = vst [vmem:[%s238 + $0x18] sm:$0xff] %v653
        %671 = vst [vmem:[%s238 + $0x20] sm:$0xff] %v656
        %672 = vst [vmem:[%s238 + $0x28] sm:$0xff] %v659
        %673 = vst [vmem:[%s238 + $0x30] sm:$0xff] %v662
        %674 = vst [vmem:[%s238 + $0x38] sm:$0xff] %v665
        %v675 = vadd.f32 %v644, %v647
        %v676 = vadd.f32 %v675, %v650
        %v677 = vadd.f32 %v676, %v653
        %v678 = vadd.f32 %v677, %v656
        %v679 = vadd.f32 %v678, %v659
        %v680 = vadd.f32 %v679, %v662
        %v681 = vadd.f32 %v680, %v665
        %v682 = vrot.slane %v681, 4
        %v683 = vadd.f32 %v681, %v682
        %v684 = vrot.slane %v683, 2
        %v685 = vadd.f32 %v683, %v684
        %v686 = vrot.slane %v685, 1
        %v687 = vadd.f32 %v685, %v686
        %688 = vst [vmem:[%s244] sm:$0x1] %v687
        %v689 = vmul.f32 %v644, %v644
        %v690 = vmul.f32 %v647, %v647
        %v691 = vmul.f32 %v650, %v650
        %v692 = vmul.f32 %v653, %v653
        %v693 = vmul.f32 %v656, %v656
        %v694 = vmul.f32 %v659, %v659
        %v695 = vmul.f32 %v662, %v662
        %v696 = vmul.f32 %v665, %v665
        %v697 = vadd.f32 %v689, %v690
        %v698 = vadd.f32 %v697, %v691
        %v699 = vadd.f32 %v698, %v692
        %v700 = vadd.f32 %v699, %v693
        %v701 = vadd.f32 %v700, %v694
        %v702 = vadd.f32 %v701, %v695
        %v703 = vadd.f32 %v702, %v696
        %v704 = vrot.slane %v703, 4
        %v705 = vadd.f32 %v703, %v704
        %v706 = vrot.slane %v705, 2
        %v707 = vadd.f32 %v705, %v706
        %v708 = vrot.slane %v707, 1
        %v709 = vadd.f32 %v707, %v708
        %710 = vst [vmem:[%s250] sm:$0x1] %v709
        %s711 = sand.u32 %s81, 1
        %s712 = scalar_lea.sflag [#allocation5], %s711
        %s713 = sand.u32 %s81, 1
        %s714 = smul.addr %s713, 64
        %s715 = scalar_lea.vmem [#allocation8], %s714
        %s716 = sand.u32 %s26, 1
        %s717 = scalar_lea.sflag [#allocation10], %s716
        %s718 = sand.u32 %s107, 1
        %s719 = scalar_lea.vmem [#allocation9], %s718
        %s720 = sand.u32 %s26, 1
        %s721 = scalar_lea.sflag [#allocation10], %s720
        %s722 = sand.u32 %s133, 1
        %s723 = scalar_lea.vmem [#allocation11], %s722
        // Predicated region
        $region37: #{tpu_custom_call.1} parent=27 // pred_check
          %p724 = pneg %p91
        $region38: #{tpu_custom_call.1} parent=27 // pred_check_branch
          %726 = sbr.rel (%p724) target = $region40
        $region39: #{tpu_custom_call.1} parent=27 // pred_region
          %728 = vsyncadd %s712, 0
          %s729 = smul.addr %s26, 8
          %s730 = smul.addr %s729, 8
          %s731 = scalar_lea.hbm %s2, %s730
          %s732 = sshll.u32 %s715, 4
          %s733 = int_to_ptr.vmem [resolvable:$true] %s732
          %s734 = sshll.u32 %s731, 4
          %s735 = int_to_ptr.hbm [resolvable:$true] %s734
          %740 = dma.vmem_to_hbm [thread:$0]  %s733, 1024, %s735, %s712, 128, 128, 8
        $region40: #{tpu_custom_call.1} parent=27 // pred_fallthru
          _
        // Predicated region
        $region41: #{tpu_custom_call.1} parent=27 // pred_check
          %p741 = pneg %p117
        $region42: #{tpu_custom_call.1} parent=27 // pred_check_branch
          %743 = sbr.rel (%p741) target = $region44
        $region43: #{tpu_custom_call.1} parent=27 // pred_region
          %745 = vsyncadd %s717, 0
          %s746 = scalar_lea.hbm %s3, %s26
          %s748 = sshll.u32 %s719, 4
          %s749 = int_to_ptr.vmem [resolvable:$true] %s748
          %s750 = sshll.u32 %s746, 4
          %s751 = int_to_ptr.hbm [resolvable:$true] %s750
          %753 = dma.vmem_to_hbm [thread:$0]  %s749, 16, %s751, %s717
        $region44: #{tpu_custom_call.1} parent=27 // pred_fallthru
          _
        // Predicated region
        $region45: #{tpu_custom_call.1} parent=27 // pred_check
          %p754 = pneg %p143
        $region46: #{tpu_custom_call.1} parent=27 // pred_check_branch
          %756 = sbr.rel (%p754) target = $region48
        $region47: #{tpu_custom_call.1} parent=27 // pred_region
          %758 = vsyncadd %s721, 0
          %s759 = scalar_lea.hbm %s4, %s26
          %s761 = sshll.u32 %s723, 4
          %s762 = int_to_ptr.vmem [resolvable:$true] %s761
          %s763 = sshll.u32 %s759, 4
          %s764 = int_to_ptr.hbm [resolvable:$true] %s763
          %766 = dma.vmem_to_hbm [thread:$0]  %s762, 16, %s764, %s721
        $region48: #{tpu_custom_call.1} parent=27 // pred_fallthru
          _
      $region28: #{tpu_custom_call.1} parent=5 // pred_fallthru
        _
      %p767 = scmp.le.s32.totalorder 2, %s21
      // Predicated region
      $region49: #{tpu_custom_call.1} parent=5 // pred_check
        %p768 = pneg %p767
      $region50: #{tpu_custom_call.1} parent=5 // pred_check_branch
        %770 = sbr.rel (%p768) target = $region52
      $region51: #{tpu_custom_call.1} parent=5 // pred_region
        %s771 = ssub.s32 %s21, 2
        // Predicated region
        $region53: #{tpu_custom_call.1} parent=51 // pred_check
          %p772 = pneg %p97
        $region54: #{tpu_custom_call.1} parent=51 // pred_check_branch
          %774 = sbr.rel (%p772) target = $region56
        $region55: #{tpu_custom_call.1} parent=51 // pred_region
          %s775 = sand.u32 %s82, 1
          %s776 = scalar_lea.sflag [#allocation5], %s775
          %s777 = sand.u32 %s82, 1
          %s778 = smul.addr %s777, 64
          %s779 = scalar_lea.vmem [#allocation8], %s778
          %781 = dma.done %s776, 1024
        $region56: #{tpu_custom_call.1} parent=51 // pred_fallthru
          _
        // Predicated region
        $region57: #{tpu_custom_call.1} parent=51 // pred_check
          %p782 = pneg %p123
        $region58: #{tpu_custom_call.1} parent=51 // pred_check_branch
          %784 = sbr.rel (%p782) target = $region60
        $region59: #{tpu_custom_call.1} parent=51 // pred_region
          %s785 = sand.u32 %s27, 1
          %s786 = scalar_lea.sflag [#allocation10], %s785
          %s787 = sand.u32 %s108, 1
          %s788 = scalar_lea.vmem [#allocation9], %s787
          %790 = dma.done %s786, 16
        $region60: #{tpu_custom_call.1} parent=51 // pred_fallthru
          _
        // Predicated region
        $region61: #{tpu_custom_call.1} parent=51 // pred_check
          %p791 = pneg %p149
        $region62: #{tpu_custom_call.1} parent=51 // pred_check_branch
          %793 = sbr.rel (%p791) target = $region64
        $region63: #{tpu_custom_call.1} parent=51 // pred_region
          %s794 = sand.u32 %s27, 1
          %s795 = scalar_lea.sflag [#allocation10], %s794
          %s796 = sand.u32 %s134, 1
          %s797 = scalar_lea.vmem [#allocation11], %s796
          %799 = dma.done %s795, 16
        $region64: #{tpu_custom_call.1} parent=51 // pred_fallthru
          _
      $region52: #{tpu_custom_call.1} parent=5 // pred_fallthru
        _
    $region6: #{tpu_custom_call.1} parent=1 // loop_footer
      %s25 = sadd.s32 1, %s21
    $region7: #{tpu_custom_call.1} parent=1 // loop_footer_branch
      %20 = sbr.rel target = $region3
    $region8: #{tpu_custom_call.1} parent=1 // loop_exit
      _
    %800 = vsyncpa [#allocation4], 1
    %s801 = scalar_lea.sflag [#allocation4], 1
    %802 = vsyncpa %s801, 1
    %803 = vsyncpa [#allocation7], 1
    %804 = vsyncpa [#allocation5], 1
    %s805 = scalar_lea.sflag [#allocation5], 1
    %806 = vsyncpa %s805, 1
    %807 = vsyncpa [#allocation10], 1
    %s808 = scalar_lea.sflag [#allocation10], 1
    %809 = vsyncpa %s808, 1

</llo_original>
